<compile_context>
chip_gen: v5e
topology: v5e:2x2
jax: 0.10.0
libtpu: 0.0.40
codegen_flags: <defaults>
</compile_context>

<pallas_src>
import functools
from math import sqrt

import jax
import jax.numpy as jnp
from jax import lax
from jax.experimental import pallas as pl
from jax.experimental.pallas import tpu as pltpu


def _round_up(x, m):
    return ((x + m - 1) // m) * m


def _dense_lif_kernel(x_ref, w_ref, o_ref, acc_ref, v_ref, *,
                      threshold, scaling, alpha, n_t, bt):
    """One (fout-tile, batch-tile, time-chunk) grid step.

    x_ref  : (Tc*Bt, F_in_p) bf16  rows ordered (t, batch-within-tile);
                                   column `f_in` holds 1.0 (bias folded into W).
    w_ref  : (F_in_p, Fot)   bf16  W^T tile; mult_factor and bias folded in.
    o_ref  : (Tc*Bt, Fot)    bf16  spike output (scaling * spike).
    acc_ref: (Tc*Bt, Fot)    f32   pre-activation scratch (matmul result).
    v_ref  : (Bt, Fot)       f32   membrane state, persistent across the
                                   "arbitrary" time-chunk grid axis.
    """
    @pl.when(pl.program_id(2) == 0)
    def _():
        v_ref[...] = jnp.zeros_like(v_ref)

    # MXU: bf16 operands, f32 accumulation. Bias rides in via the 1.0 column.
    acc_ref[...] = jnp.dot(x_ref[...], w_ref[...],
                           preferred_element_type=jnp.float32)

    def step(rows, v):
        v = alpha * v + acc_ref[rows, :]                 # mult_factor pre-folded
        mask = v >= threshold
        o_ref[rows, :] = jnp.where(mask, scaling, 0.0).astype(o_ref.dtype)
        return jnp.where(mask, v - threshold, v)         # subtract reset

    v = v_ref[...]
    if n_t <= 32:
        # Fully static unroll: static slice starts, best LLO scheduling.
        for t in range(n_t):
            v = step(pl.ds(t * bt, bt), v)
    else:
        def body(t, v):
            return step(pl.ds(pl.multiple_of(t * bt, bt), bt), v)
        v = lax.fori_loop(0, n_t, body, v, unroll=8)
    v_ref[...] = v


def dense_forward(x, weight, bias, *, threshold, scaling, mult_factor, alpha,
                  batch_tile=16, fout_tile=None, vmem_budget_bytes=40 << 20):
    """x: (B, in_features, T) -> (B, out_features, T), matching PyTorch Dense."""
    B, f_in, T = x.shape
    f_out = weight.shape[0]
    if bias is None:
        bias = jnp.zeros((f_out,), jnp.float32)

    # Feature padding; reserve one K column for the bias (fed through the MXU).
    f_in_p = _round_up(f_in + 1, 128)
    f_out_p = _round_up(f_out, 128)

    # Batch / time tiling. batch_tile=16 keeps the bf16 x/o blocks (16,128)
    # tile-aligned for any T; time chunks cap the rows per DMA block (~512).
    b_p = _round_up(B, batch_tile)
    nb = b_p // batch_tile
    t_chunk = min(T, max(1, 512 // batch_tile))
    ntc = pl.cdiv(T, t_chunk)
    t_p = ntc * t_chunk
    rows = t_chunk * batch_tile                   # rows per grid block

    # VMEM-aware f_out tile (v7x: 64 MiB physical; v5e: 16 MiB scoped default).
    if fout_tile is None:
        fout_tile = f_out_p

        def vmem_need(fot):
            return (2 * (rows * f_in_p * 2        # x, double-buffered bf16
                         + f_in_p * fot * 2       # w, double-buffered bf16
                         + rows * fot * 2)        # o, double-buffered bf16
                    + rows * fot * 4              # pre-activation scratch f32
                    + batch_tile * fot * 4)       # membrane scratch f32

        while fout_tile > 128 and vmem_need(fout_tile) > vmem_budget_bytes:
            fout_tile = _round_up(fout_tile // 2, 128)
        # Give v7x's second TensorCore work when the grid would be a single step.
        if nb * ntc == 1 and fout_tile == f_out_p and f_out_p >= 256:
            fout_tile = _round_up(f_out_p // 2, 128)
    f_out_p = _round_up(f_out_p, fout_tile)
    nfo = f_out_p // fout_tile

    # ---- layout glue (XLA): pad, bias column, order rows (b, t, batch-in-tile).
    x1 = jnp.transpose(x, (0, 2, 1))                                  # (B, T, F_in)
    x1 = jnp.pad(x1, ((0, b_p - B), (0, t_p - T), (0, f_in_p - f_in)))
    x1 = x1.at[..., f_in].set(1.0)                                    # bias column
    x1 = x1.reshape(nb, batch_tile, t_p, f_in_p)
    x1 = jnp.transpose(x1, (0, 2, 1, 3))                              # (nb, Tp, Bt, Fin)
    x1 = x1.reshape(nb * t_p * batch_tile, f_in_p).astype(jnp.bfloat16)
    # TODO(synk): when stacking Dense layers, keep this (nb, T, Bt, F) layout
    # between layers so the transpose/pad glue is not paid once per layer.

    w_t = jnp.zeros((f_in_p, f_out_p), jnp.float32)
    w_t = w_t.at[:f_in, :f_out].set(mult_factor * weight.T)
    w_t = w_t.at[f_in, :f_out].set(mult_factor * bias)                # bias row
    w_t = w_t.astype(jnp.bfloat16)

    kernel = functools.partial(
        _dense_lif_kernel,
        threshold=float(threshold), scaling=float(scaling),
        alpha=float(alpha), n_t=t_chunk, bt=batch_tile,
    )

    out = pl.pallas_call(
        kernel,
        out_shape=jax.ShapeDtypeStruct((nb * t_p * batch_tile, f_out_p),
                                       jnp.bfloat16),
        grid_spec=pltpu.PrefetchScalarGridSpec(
            num_scalar_prefetch=0,
            # Weight-stationary grid order: fout tile (j) outermost so each
            # weight tile is DMA'd exactly once; time chunks are innermost and
            # "arbitrary" so the membrane scratch carries across them.
            grid=(nfo, nb, ntc),
            in_specs=[
                pl.BlockSpec((rows, f_in_p), lambda j, b, tc: (b * ntc + tc, 0)),
                pl.BlockSpec((f_in_p, fout_tile), lambda j, b, tc: (0, j)),
            ],
            out_specs=pl.BlockSpec((rows, fout_tile),
                                   lambda j, b, tc: (b * ntc + tc, j)),
            scratch_shapes=[
                pltpu.VMEM((rows, fout_tile), jnp.float32),        # pre-activations
                pltpu.VMEM((batch_tile, fout_tile), jnp.float32),  # membrane state
            ],
        ),
        compiler_params=pltpu.CompilerParams(
            dimension_semantics=("parallel", "parallel", "arbitrary"),
            vmem_limit_bytes=48 << 20,
        ),
    )(x1, w_t)

    # ---- un-glue: (nb*Tp*Bt, F_out_p) -> (B, F_out, T), f32 like the module.
    out = out.reshape(nb, t_p, batch_tile, f_out_p)
    out = jnp.transpose(out, (0, 2, 3, 1)).reshape(b_p, f_out_p, t_p)
    return out[:B, :f_out, :T].astype(jnp.float32)


def _reference(x, weight, bias, *, threshold, scaling, mult_factor, alpha):
    """Pure-JAX reference with the same bf16 MXU-operand rounding as the kernel."""
    xb = x.astype(jnp.bfloat16).astype(jnp.float32)
    wb = (mult_factor * weight).astype(jnp.bfloat16).astype(jnp.float32)
    bb = (mult_factor * bias).astype(jnp.bfloat16).astype(jnp.float32)
    pre = jnp.einsum('bft,of->bot', xb, wb) + bb[None, :, None]   # (B, F_out, T)
    B, f_out, T = pre.shape
    v = jnp.zeros((B, f_out), jnp.float32)
    outs = []
    for t in range(T):
        v = alpha * v + pre[:, :, t]
        spike = v >= threshold
        outs.append(jnp.where(spike, scaling, 0.0))
        v = jnp.where(spike, v - threshold, v)
    return jnp.stack(outs, axis=-1).astype(jnp.float32)


if __name__ == "__main__":
    # Module hyper-parameters (use_default_initialization=False, mean_gain=0, std_gain=1)
    in_features = 32
    out_features = 64
    batch = 2
    timesteps = 8
    threshold = 1.0
    scaling = 1.0
    mult_factor = 1.0
    alpha = 0.9

    key = jax.random.PRNGKey(0)
    k_x, k_w, k_b = jax.random.split(key, 3)

    std = sqrt(1.0 / in_features)          # sqrt(std_gain / in_features)
    mean = 0.0                             # mean_gain * threshold / in_features
    weight = jax.random.uniform(
        k_w, (out_features, in_features), jnp.float32,
        minval=mean - std, maxval=mean + std)
    bias = jax.random.uniform(
        k_b, (out_features,), jnp.float32, minval=-std, maxval=std)

    x = jax.random.normal(k_x, (batch, in_features, timesteps), jnp.float32)

    out = dense_forward(
        x, weight, bias,
        threshold=threshold, scaling=scaling,
        mult_factor=mult_factor, alpha=alpha,
    )
    out = jax.block_until_ready(out)
    assert out.shape == (batch, out_features, timesteps)

    ref = _reference(x, weight, bias, threshold=threshold, scaling=scaling,
                     mult_factor=mult_factor, alpha=alpha)
    # Tolerate rare near-threshold spike flips from accumulation-order diffs.
    mismatch = float(jnp.mean(jnp.abs(out - ref) > 1e-3))
    assert mismatch < 0.01, f"mismatch fraction too high: {mismatch}"
    print("KERNEL_OK")
</pallas_src>

<mosaic_0001>
module attributes {stable_mosaic.version = 11 : i64} {
  func.func @_dense_lif_kernel(%arg0: i32, %arg1: i32, %arg2: i32, %arg3: memref<128x128xbf16, #tpu.memory_space<vmem>>, %arg4: memref<128x128xbf16, #tpu.memory_space<vmem>>, %arg5: memref<128x128xbf16, #tpu.memory_space<vmem>>, %arg6: memref<128x128xf32, #tpu.memory_space<vmem>>, %arg7: memref<16x128xf32, #tpu.memory_space<vmem>>) attributes {dimension_semantics = [#tpu.dimension_semantics<parallel>, #tpu.dimension_semantics<parallel>, #tpu.dimension_semantics<arbitrary>], iteration_bounds = array<i64: 1, 1, 1>, scalar_prefetch = 0 : i64, scratch_operands = 2 : i64, tpu.core_type = #tpu.core_type<tc>, window_params = [{transform_indices = @transform_0, window_bounds = array<i64: 128, 128>}, {transform_indices = @transform_1, window_bounds = array<i64: 128, 128>}, {transform_indices = @transform_2, window_bounds = array<i64: 128, 128>}]} {
    %c0_i32 = arith.constant 0 : i32
    %0 = arith.cmpi eq, %arg2, %c0_i32 : i32
    %1 = arith.extui %0 : i1 to i32
    %c0_i32_0 = arith.constant 0 : i32
    %2 = arith.cmpi ne, %1, %c0_i32_0 : i32
    scf.if %2 {
      %cst_75 = arith.constant 0.000000e+00 : f32
      %121 = vector.broadcast %cst_75 : f32 to vector<16x128xf32>
      %c0_76 = arith.constant 0 : index
      %c0_77 = arith.constant 0 : index
      %122 = vector.load %arg7[%c0_76, %c0_77] : memref<16x128xf32, #tpu.memory_space<vmem>>, vector<16x128xf32>
      tpu.vector_store %arg7[%c0_76, %c0_77], %121 {strides = array<i32>} : memref<16x128xf32, #tpu.memory_space<vmem>>, vector<16x128xf32>,
    } else {
    }
    %c0 = arith.constant 0 : index
    %c0_1 = arith.constant 0 : index
    %3 = vector.load %arg3[%c0, %c0_1] : memref<128x128xbf16, #tpu.memory_space<vmem>>, vector<128x128xbf16>
    %c0_2 = arith.constant 0 : index
    %c0_3 = arith.constant 0 : index
    %4 = vector.load %arg4[%c0_2, %c0_3] : memref<128x128xbf16, #tpu.memory_space<vmem>>, vector<128x128xbf16>
    %cst = arith.constant dense<0.000000e+00> : vector<128x128xf32>
    %5 = tpu.matmul %3, %4, %cst {dimension_numbers = #tpu.dot_dimension_numbers<[1], [0], [0], [1], [0, 0, 1, 1], [], []>} : vector<128x128xbf16>, vector<128x128xbf16>, vector<128x128xf32> -> vector<128x128xf32>
    %c0_4 = arith.constant 0 : index
    %c0_5 = arith.constant 0 : index
    %6 = vector.load %arg6[%c0_4, %c0_5] : memref<128x128xf32, #tpu.memory_space<vmem>>, vector<128x128xf32>
    tpu.vector_store %arg6[%c0_4, %c0_5], %5 {strides = array<i32>} : memref<128x128xf32, #tpu.memory_space<vmem>>, vector<128x128xf32>,
    %c0_6 = arith.constant 0 : index
    %c0_7 = arith.constant 0 : index
    %7 = vector.load %arg7[%c0_6, %c0_7] : memref<16x128xf32, #tpu.memory_space<vmem>>, vector<16x128xf32>
    %cst_8 = arith.constant 0.899999976 : f32
    %8 = vector.broadcast %cst_8 : f32 to vector<16x128xf32>
    %9 = arith.mulf %8, %7 : vector<16x128xf32>
    %c0_9 = arith.constant 0 : index
    %c0_10 = arith.constant 0 : index
    %10 = vector.load %arg6[%c0_9, %c0_10] : memref<128x128xf32, #tpu.memory_space<vmem>>, vector<16x128xf32>
    %11 = arith.addf %9, %10 : vector<16x128xf32>
    %cst_11 = arith.constant 1.000000e+00 : f32
    %12 = vector.broadcast %cst_11 : f32 to vector<16x128xf32>
    %13 = arith.cmpf oge, %11, %12 : vector<16x128xf32>
    %cst_12 = arith.constant 1.000000e+00 : f32
    %cst_13 = arith.constant 0.000000e+00 : f32
    %14 = vector.broadcast %cst_12 : f32 to vector<16x128xf32>
    %15 = vector.broadcast %cst_13 : f32 to vector<16x128xf32>
    %16 = arith.select %13, %14, %15 : vector<16x128xi1>, vector<16x128xf32>
    %17 = arith.truncf %16 : vector<16x128xf32> to vector<16x128xbf16>
    %c0_14 = arith.constant 0 : index
    %c0_15 = arith.constant 0 : index
    %18 = vector.load %arg5[%c0_14, %c0_15] : memref<128x128xbf16, #tpu.memory_space<vmem>>, vector<16x128xbf16>
    tpu.vector_store %arg5[%c0_14, %c0_15], %17 {strides = array<i32>} : memref<128x128xbf16, #tpu.memory_space<vmem>>, vector<16x128xbf16>,
    %cst_16 = arith.constant 1.000000e+00 : f32
    %19 = vector.broadcast %cst_16 : f32 to vector<16x128xf32>
    %20 = arith.subf %11, %19 : vector<16x128xf32>
    %21 = arith.select %13, %20, %11 : vector<16x128xi1>, vector<16x128xf32>
    %cst_17 = arith.constant 0.899999976 : f32
    %22 = vector.broadcast %cst_17 : f32 to vector<16x128xf32>
    %23 = arith.mulf %22, %21 : vector<16x128xf32>
    %c16 = arith.constant 16 : index
    %c0_18 = arith.constant 0 : index
    %24 = vector.load %arg6[%c16, %c0_18] : memref<128x128xf32, #tpu.memory_space<vmem>>, vector<16x128xf32>
    %25 = arith.addf %23, %24 : vector<16x128xf32>
    %cst_19 = arith.constant 1.000000e+00 : f32
    %26 = vector.broadcast %cst_19 : f32 to vector<16x128xf32>
    %27 = arith.cmpf oge, %25, %26 : vector<16x128xf32>
    %cst_20 = arith.constant 1.000000e+00 : f32
    %cst_21 = arith.constant 0.000000e+00 : f32
    %28 = vector.broadcast %cst_20 : f32 to vector<16x128xf32>
    %29 = vector.broadcast %cst_21 : f32 to vector<16x128xf32>
    %30 = arith.select %27, %28, %29 : vector<16x128xi1>, vector<16x128xf32>
    %31 = arith.truncf %30 : vector<16x128xf32> to vector<16x128xbf16>
    %c16_22 = arith.constant 16 : index
    %c0_23 = arith.constant 0 : index
    %32 = vector.load %arg5[%c16_22, %c0_23] : memref<128x128xbf16, #tpu.memory_space<vmem>>, vector<16x128xbf16>
    tpu.vector_store %arg5[%c16_22, %c0_23], %31 {strides = array<i32>} : memref<128x128xbf16, #tpu.memory_space<vmem>>, vector<16x128xbf16>,
    %cst_24 = arith.constant 1.000000e+00 : f32
    %33 = vector.broadcast %cst_24 : f32 to vector<16x128xf32>
    %34 = arith.subf %25, %33 : vector<16x128xf32>
    %35 = arith.select %27, %34, %25 : vector<16x128xi1>, vector<16x128xf32>
    %cst_25 = arith.constant 0.899999976 : f32
    %36 = vector.broadcast %cst_25 : f32 to vector<16x128xf32>
    %37 = arith.mulf %36, %35 : vector<16x128xf32>
    %c32 = arith.constant 32 : index
    %c0_26 = arith.constant 0 : index
    %38 = vector.load %arg6[%c32, %c0_26] : memref<128x128xf32, #tpu.memory_space<vmem>>, vector<16x128xf32>
    %39 = arith.addf %37, %38 : vector<16x128xf32>
    %cst_27 = arith.constant 1.000000e+00 : f32
    %40 = vector.broadcast %cst_27 : f32 to vector<16x128xf32>
    %41 = arith.cmpf oge, %39, %40 : vector<16x128xf32>
    %cst_28 = arith.constant 1.000000e+00 : f32
    %cst_29 = arith.constant 0.000000e+00 : f32
    %42 = vector.broadcast %cst_28 : f32 to vector<16x128xf32>
    %43 = vector.broadcast %cst_29 : f32 to vector<16x128xf32>
    %44 = arith.select %41, %42, %43 : vector<16x128xi1>, vector<16x128xf32>
    %45 = arith.truncf %44 : vector<16x128xf32> to vector<16x128xbf16>
    %c32_30 = arith.constant 32 : index
    %c0_31 = arith.constant 0 : index
    %46 = vector.load %arg5[%c32_30, %c0_31] : memref<128x128xbf16, #tpu.memory_space<vmem>>, vector<16x128xbf16>
    tpu.vector_store %arg5[%c32_30, %c0_31], %45 {strides = array<i32>} : memref<128x128xbf16, #tpu.memory_space<vmem>>, vector<16x128xbf16>,
    %cst_32 = arith.constant 1.000000e+00 : f32
    %47 = vector.broadcast %cst_32 : f32 to vector<16x128xf32>
    %48 = arith.subf %39, %47 : vector<16x128xf32>
    %49 = arith.select %41, %48, %39 : vector<16x128xi1>, vector<16x128xf32>
    %cst_33 = arith.constant 0.899999976 : f32
    %50 = vector.broadcast %cst_33 : f32 to vector<16x128xf32>
    %51 = arith.mulf %50, %49 : vector<16x128xf32>
    %c48 = arith.constant 48 : index
    %c0_34 = arith.constant 0 : index
    %52 = vector.load %arg6[%c48, %c0_34] : memref<128x128xf32, #tpu.memory_space<vmem>>, vector<16x128xf32>
    %53 = arith.addf %51, %52 : vector<16x128xf32>
    %cst_35 = arith.constant 1.000000e+00 : f32
    %54 = vector.broadcast %cst_35 : f32 to vector<16x128xf32>
    %55 = arith.cmpf oge, %53, %54 : vector<16x128xf32>
    %cst_36 = arith.constant 1.000000e+00 : f32
    %cst_37 = arith.constant 0.000000e+00 : f32
    %56 = vector.broadcast %cst_36 : f32 to vector<16x128xf32>
    %57 = vector.broadcast %cst_37 : f32 to vector<16x128xf32>
    %58 = arith.select %55, %56, %57 : vector<16x128xi1>, vector<16x128xf32>
    %59 = arith.truncf %58 : vector<16x128xf32> to vector<16x128xbf16>
    %c48_38 = arith.constant 48 : index
    %c0_39 = arith.constant 0 : index
    %60 = vector.load %arg5[%c48_38, %c0_39] : memref<128x128xbf16, #tpu.memory_space<vmem>>, vector<16x128xbf16>
    tpu.vector_store %arg5[%c48_38, %c0_39], %59 {strides = array<i32>} : memref<128x128xbf16, #tpu.memory_space<vmem>>, vector<16x128xbf16>,
    %cst_40 = arith.constant 1.000000e+00 : f32
    %61 = vector.broadcast %cst_40 : f32 to vector<16x128xf32>
    %62 = arith.subf %53, %61 : vector<16x128xf32>
    %63 = arith.select %55, %62, %53 : vector<16x128xi1>, vector<16x128xf32>
    %cst_41 = arith.constant 0.899999976 : f32
    %64 = vector.broadcast %cst_41 : f32 to vector<16x128xf32>
    %65 = arith.mulf %64, %63 : vector<16x128xf32>
    %c64 = arith.constant 64 : index
    %c0_42 = arith.constant 0 : index
    %66 = vector.load %arg6[%c64, %c0_42] : memref<128x128xf32, #tpu.memory_space<vmem>>, vector<16x128xf32>
    %67 = arith.addf %65, %66 : vector<16x128xf32>
    %cst_43 = arith.constant 1.000000e+00 : f32
    %68 = vector.broadcast %cst_43 : f32 to vector<16x128xf32>
    %69 = arith.cmpf oge, %67, %68 : vector<16x128xf32>
    %cst_44 = arith.constant 1.000000e+00 : f32
    %cst_45 = arith.constant 0.000000e+00 : f32
    %70 = vector.broadcast %cst_44 : f32 to vector<16x128xf32>
    %71 = vector.broadcast %cst_45 : f32 to vector<16x128xf32>
    %72 = arith.select %69, %70, %71 : vector<16x128xi1>, vector<16x128xf32>
    %73 = arith.truncf %72 : vector<16x128xf32> to vector<16x128xbf16>
    %c64_46 = arith.constant 64 : index
    %c0_47 = arith.constant 0 : index
    %74 = vector.load %arg5[%c64_46, %c0_47] : memref<128x128xbf16, #tpu.memory_space<vmem>>, vector<16x128xbf16>
    tpu.vector_store %arg5[%c64_46, %c0_47], %73 {strides = array<i32>} : memref<128x128xbf16, #tpu.memory_space<vmem>>, vector<16x128xbf16>,
    %cst_48 = arith.constant 1.000000e+00 : f32
    %75 = vector.broadcast %cst_48 : f32 to vector<16x128xf32>
    %76 = arith.subf %67, %75 : vector<16x128xf32>
    %77 = arith.select %69, %76, %67 : vector<16x128xi1>, vector<16x128xf32>
    %cst_49 = arith.constant 0.899999976 : f32
    %78 = vector.broadcast %cst_49 : f32 to vector<16x128xf32>
    %79 = arith.mulf %78, %77 : vector<16x128xf32>
    %c80 = arith.constant 80 : index
    %c0_50 = arith.constant 0 : index
    %80 = vector.load %arg6[%c80, %c0_50] : memref<128x128xf32, #tpu.memory_space<vmem>>, vector<16x128xf32>
    %81 = arith.addf %79, %80 : vector<16x128xf32>
    %cst_51 = arith.constant 1.000000e+00 : f32
    %82 = vector.broadcast %cst_51 : f32 to vector<16x128xf32>
    %83 = arith.cmpf oge, %81, %82 : vector<16x128xf32>
    %cst_52 = arith.constant 1.000000e+00 : f32
    %cst_53 = arith.constant 0.000000e+00 : f32
    %84 = vector.broadcast %cst_52 : f32 to vector<16x128xf32>
    %85 = vector.broadcast %cst_53 : f32 to vector<16x128xf32>
    %86 = arith.select %83, %84, %85 : vector<16x128xi1>, vector<16x128xf32>
    %87 = arith.truncf %86 : vector<16x128xf32> to vector<16x128xbf16>
    %c80_54 = arith.constant 80 : index
    %c0_55 = arith.constant 0 : index
    %88 = vector.load %arg5[%c80_54, %c0_55] : memref<128x128xbf16, #tpu.memory_space<vmem>>, vector<16x128xbf16>
    tpu.vector_store %arg5[%c80_54, %c0_55], %87 {strides = array<i32>} : memref<128x128xbf16, #tpu.memory_space<vmem>>, vector<16x128xbf16>,
    %cst_56 = arith.constant 1.000000e+00 : f32
    %89 = vector.broadcast %cst_56 : f32 to vector<16x128xf32>
    %90 = arith.subf %81, %89 : vector<16x128xf32>
    %91 = arith.select %83, %90, %81 : vector<16x128xi1>, vector<16x128xf32>
    %cst_57 = arith.constant 0.899999976 : f32
    %92 = vector.broadcast %cst_57 : f32 to vector<16x128xf32>
    %93 = arith.mulf %92, %91 : vector<16x128xf32>
    %c96 = arith.constant 96 : index
    %c0_58 = arith.constant 0 : index
    %94 = vector.load %arg6[%c96, %c0_58] : memref<128x128xf32, #tpu.memory_space<vmem>>, vector<16x128xf32>
    %95 = arith.addf %93, %94 : vector<16x128xf32>
    %cst_59 = arith.constant 1.000000e+00 : f32
    %96 = vector.broadcast %cst_59 : f32 to vector<16x128xf32>
    %97 = arith.cmpf oge, %95, %96 : vector<16x128xf32>
    %cst_60 = arith.constant 1.000000e+00 : f32
    %cst_61 = arith.constant 0.000000e+00 : f32
    %98 = vector.broadcast %cst_60 : f32 to vector<16x128xf32>
    %99 = vector.broadcast %cst_61 : f32 to vector<16x128xf32>
    %100 = arith.select %97, %98, %99 : vector<16x128xi1>, vector<16x128xf32>
    %101 = arith.truncf %100 : vector<16x128xf32> to vector<16x128xbf16>
    %c96_62 = arith.constant 96 : index
    %c0_63 = arith.constant 0 : index
    %102 = vector.load %arg5[%c96_62, %c0_63] : memref<128x128xbf16, #tpu.memory_space<vmem>>, vector<16x128xbf16>
    tpu.vector_store %arg5[%c96_62, %c0_63], %101 {strides = array<i32>} : memref<128x128xbf16, #tpu.memory_space<vmem>>, vector<16x128xbf16>,
    %cst_64 = arith.constant 1.000000e+00 : f32
    %103 = vector.broadcast %cst_64 : f32 to vector<16x128xf32>
    %104 = arith.subf %95, %103 : vector<16x128xf32>
    %105 = arith.select %97, %104, %95 : vector<16x128xi1>, vector<16x128xf32>
    %cst_65 = arith.constant 0.899999976 : f32
    %106 = vector.broadcast %cst_65 : f32 to vector<16x128xf32>
    %107 = arith.mulf %106, %105 : vector<16x128xf32>
    %c112 = arith.constant 112 : index
    %c0_66 = arith.constant 0 : index
    %108 = vector.load %arg6[%c112, %c0_66] : memref<128x128xf32, #tpu.memory_space<vmem>>, vector<16x128xf32>
    %109 = arith.addf %107, %108 : vector<16x128xf32>
    %cst_67 = arith.constant 1.000000e+00 : f32
    %110 = vector.broadcast %cst_67 : f32 to vector<16x128xf32>
    %111 = arith.cmpf oge, %109, %110 : vector<16x128xf32>
    %cst_68 = arith.constant 1.000000e+00 : f32
    %cst_69 = arith.constant 0.000000e+00 : f32
    %112 = vector.broadcast %cst_68 : f32 to vector<16x128xf32>
    %113 = vector.broadcast %cst_69 : f32 to vector<16x128xf32>
    %114 = arith.select %111, %112, %113 : vector<16x128xi1>, vector<16x128xf32>
    %115 = arith.truncf %114 : vector<16x128xf32> to vector<16x128xbf16>
    %c112_70 = arith.constant 112 : index
    %c0_71 = arith.constant 0 : index
    %116 = vector.load %arg5[%c112_70, %c0_71] : memref<128x128xbf16, #tpu.memory_space<vmem>>, vector<16x128xbf16>
    tpu.vector_store %arg5[%c112_70, %c0_71], %115 {strides = array<i32>} : memref<128x128xbf16, #tpu.memory_space<vmem>>, vector<16x128xbf16>,
    %cst_72 = arith.constant 1.000000e+00 : f32
    %117 = vector.broadcast %cst_72 : f32 to vector<16x128xf32>
    %118 = arith.subf %109, %117 : vector<16x128xf32>
    %119 = arith.select %111, %118, %109 : vector<16x128xi1>, vector<16x128xf32>
    %c0_73 = arith.constant 0 : index
    %c0_74 = arith.constant 0 : index
    %120 = vector.load %arg7[%c0_73, %c0_74] : memref<16x128xf32, #tpu.memory_space<vmem>>, vector<16x128xf32>
    tpu.vector_store %arg7[%c0_73, %c0_74], %119 {strides = array<i32>} : memref<16x128xf32, #tpu.memory_space<vmem>>, vector<16x128xf32>,
    return
  }
  func.func @transform_0(%arg0: i32, %arg1: i32, %arg2: i32) -> (i32, i32) {
    %c1_i32 = arith.constant 1 : i32
    %0 = arith.muli %arg1, %c1_i32 : i32
    %1 = arith.addi %0, %arg2 : i32
    %c0_i32 = arith.constant 0 : i32
    %c0_i32_0 = arith.constant 0 : i32
    return %1, %c0_i32 : i32, i32
  }
  func.func @transform_1(%arg0: i32, %arg1: i32, %arg2: i32) -> (i32, i32) {
    %c0_i32 = arith.constant 0 : i32
    %c0_i32_0 = arith.constant 0 : i32
    return %c0_i32, %arg0 : i32, i32
  }
  func.func @transform_2(%arg0: i32, %arg1: i32, %arg2: i32) -> (i32, i32) {
    %c1_i32 = arith.constant 1 : i32
    %0 = arith.muli %arg1, %c1_i32 : i32
    %1 = arith.addi %0, %arg2 : i32
    %c0_i32 = arith.constant 0 : i32
    return %1, %arg0 : i32, i32
  }
}

</mosaic_0001>

<llo_original>
// kernel: tpu_custom_call.1
$region0: #{tpu_custom_call.1}
  #allocation0 [shape = 'u32[]', space=smem, size = 0x4, offset = 0x4, fixed_abs, tag = 'smem constant byte address 0x4 - core index']
  #allocation1 [shape = 'u32[72,128]{1,0:T(1,128)}', space=vmem, size = 0x9000, scoped, tag = 'internal scratch']
  #allocation2 [shape = 'f32[128,128]{1,0:T(8,128)}', space=vmem, size = 0x10000, scoped, tag = 'scratch operand']
  #allocation3 [shape = 'f32[16,128]{1,0:T(8,128)}', space=vmem, size = 0x2000, scoped, tag = 'scratch operand']
  %s0 = inlined_call_operand.hbm [shape: bf16[128,128], index: 0, kind: input, shape index: {}]
  %s1 = inlined_call_operand.hbm [shape: bf16[128,128], index: 1, kind: input, shape index: {}]
  %s2 = inlined_call_operand.hbm [shape: bf16[128,128], index: 2, kind: output, shape index: {}]
  %s3 = sld [smem:[#allocation0]]
  $region30: #{tpu_custom_call.1} parent=0
    _
  %s5 = ssub.s32 1, %s3
  %s6 = scalar_select 0, %s5, %s3
  $region1: #{tpu_custom_call.1} parent=0
    #allocation4 [shape = 'u8[32768]{0}', space=vmem, size = 0x8000, scoped, tag = 'input window, operand 0, single buffered']
    #allocation5 [shape = 's32[1]{0}', space=sflag, size = 0x4, scoped, tag = 'scoped memory for tpu_custom_call.1']
    #allocation6 [shape = 's32[1]{0}', space=sflag, size = 0x4, scoped, tag = 'scoped memory for tpu_custom_call.1']
    #allocation7 [shape = 'u8[32768]{0}', space=vmem, size = 0x8000, scoped, tag = 'input window, operand 1, single buffered']
    #allocation8 [shape = 's32[1]{0}', space=sflag, size = 0x4, scoped, tag = 'scoped memory for tpu_custom_call.1']
    #allocation9 [shape = 'u8[32768]{0}', space=vmem, size = 0x8000, scoped, tag = 'output window, operand 0, single buffered']
    %7 = vsyncpa [#allocation5], 0
    %8 = vsyncpa [#allocation8], 0
    %9 = vsyncpa [#allocation6], 0
    // Predicated region
    $region2: #{tpu_custom_call.1} parent=1 // pred_check
      _
    $region3: #{tpu_custom_call.1} parent=1 // pred_check_branch
      %11 = sbr.rel (0) target = $region5
    $region4: #{tpu_custom_call.1} parent=1 // pred_region
      %s12 = sadd.s32 0, 0
      %s13 = smul.u32 16, %s12
      %15 = vsyncadd [#allocation5], 0
      %s16 = smul.addr %s13, 4
      %s17 = scalar_lea.hbm %s0, %s16
      %s18 = sshll.u32 %s17, 4
      %s19 = int_to_ptr.hbm [resolvable:$true] %s18
      %s20 = sshll.u32 [#allocation4], 4
      %s21 = int_to_ptr.vmem [resolvable:$true] %s20
      %26 = dma.hbm_to_vmem [thread:$0]  %s19, 1024, %s21, [#allocation5], 64, 64, 4
    $region5: #{tpu_custom_call.1} parent=1 // pred_fallthru
      _
    // Predicated region
    $region6: #{tpu_custom_call.1} parent=1 // pred_check
      _
    $region7: #{tpu_custom_call.1} parent=1 // pred_check_branch
      %28 = sbr.rel (0) target = $region9
    $region8: #{tpu_custom_call.1} parent=1 // pred_region
      %30 = vsyncadd [#allocation8], 0
      %s31 = sshll.u32 %s1, 4
      %s32 = int_to_ptr.hbm [resolvable:$true] %s31
      %s33 = sshll.u32 [#allocation7], 4
      %s34 = int_to_ptr.vmem [resolvable:$true] %s33
      %39 = dma.hbm_to_vmem [thread:$0]  %s32, 1024, %s34, [#allocation8], 64, 64, 4
    $region9: #{tpu_custom_call.1} parent=1 // pred_fallthru
      _
    // Predicated region
    $region10: #{tpu_custom_call.1} parent=1 // pred_check
      _
    $region11: #{tpu_custom_call.1} parent=1 // pred_check_branch
      %41 = sbr.rel (0) target = $region13
    $region12: #{tpu_custom_call.1} parent=1 // pred_region
      %43 = dma.done [#allocation5], 1024
    $region13: #{tpu_custom_call.1} parent=1 // pred_fallthru
      _
    // Predicated region
    $region14: #{tpu_custom_call.1} parent=1 // pred_check
      _
    $region15: #{tpu_custom_call.1} parent=1 // pred_check_branch
      %45 = sbr.rel (0) target = $region17
    $region16: #{tpu_custom_call.1} parent=1 // pred_region
      %47 = dma.done [#allocation8], 1024
    $region17: #{tpu_custom_call.1} parent=1 // pred_fallthru
      _
    %s48 = sadd.s32 0, 0
    %s49 = smul.u32 16, %s48
    %s50 = sadd.s32 0, 0
    %s51 = smul.u32 16, %s50
    %p52 = scmp.eq.s32.totalorder 0, 0
    // Predicated region
    $region18: #{tpu_custom_call.1} parent=1 // pred_check
      %p53 = pneg %p52
    $region19: #{tpu_custom_call.1} parent=1 // pred_check_branch
      %55 = sbr.rel (%p53) target = $region21
    $region20: #{tpu_custom_call.1} parent=1 // pred_region
      %56 = vst [vmem:[#allocation3] sm:$0xff] 0.0
      %57 = vst [vmem:[#allocation3 + $0x8] sm:$0xff] 0.0
    $region21: #{tpu_custom_call.1} parent=1 // pred_fallthru
      _
    %v58 = vld [vmem:[#allocation4] sm:$0xf]
    %v59 = vld [vmem:[#allocation4 + $0x4] sm:$0xf]
    %v60 = vld [vmem:[#allocation4 + $0x8] sm:$0xf]
    %v61 = vld [vmem:[#allocation4 + $0xc] sm:$0xf]
    %v62 = vld [vmem:[#allocation4 + $0x10] sm:$0xf]
    %v63 = vld [vmem:[#allocation4 + $0x14] sm:$0xf]
    %v64 = vld [vmem:[#allocation4 + $0x18] sm:$0xf]
    %v65 = vld [vmem:[#allocation4 + $0x1c] sm:$0xf]
    %v66 = vld [vmem:[#allocation4 + $0x20] sm:$0xf]
    %v67 = vld [vmem:[#allocation4 + $0x24] sm:$0xf]
    %v68 = vld [vmem:[#allocation4 + $0x28] sm:$0xf]
    %v69 = vld [vmem:[#allocation4 + $0x2c] sm:$0xf]
    %v70 = vld [vmem:[#allocation4 + $0x30] sm:$0xf]
    %v71 = vld [vmem:[#allocation4 + $0x34] sm:$0xf]
    %v72 = vld [vmem:[#allocation4 + $0x38] sm:$0xf]
    %v73 = vld [vmem:[#allocation4 + $0x3c] sm:$0xf]
    %v74 = vld [vmem:[#allocation7] sm:$0xf]
    %v75 = vld [vmem:[#allocation7 + $0x4] sm:$0xf]
    %v76 = vld [vmem:[#allocation7 + $0x8] sm:$0xf]
    %v77 = vld [vmem:[#allocation7 + $0xc] sm:$0xf]
    %v78 = vld [vmem:[#allocation7 + $0x10] sm:$0xf]
    %v79 = vld [vmem:[#allocation7 + $0x14] sm:$0xf]
    %v80 = vld [vmem:[#allocation7 + $0x18] sm:$0xf]
    %v81 = vld [vmem:[#allocation7 + $0x1c] sm:$0xf]
    %v82 = vld [vmem:[#allocation7 + $0x20] sm:$0xf]
    %v83 = vld [vmem:[#allocation7 + $0x24] sm:$0xf]
    %v84 = vld [vmem:[#allocation7 + $0x28] sm:$0xf]
    %v85 = vld [vmem:[#allocation7 + $0x2c] sm:$0xf]
    %v86 = vld [vmem:[#allocation7 + $0x30] sm:$0xf]
    %v87 = vld [vmem:[#allocation7 + $0x34] sm:$0xf]
    %v88 = vld [vmem:[#allocation7 + $0x38] sm:$0xf]
    %v89 = vld [vmem:[#allocation7 + $0x3c] sm:$0xf]
    %v106 = vunpack.c.l.b16 %v58
    %v107 = vunpack.c.l.b16 %v59
    %v108 = vunpack.c.l.b16 %v60
    %v109 = vunpack.c.l.b16 %v61
    %v110 = vunpack.c.l.b16 %v62
    %v111 = vunpack.c.l.b16 %v63
    %v112 = vunpack.c.l.b16 %v64
    %v113 = vunpack.c.l.b16 %v65
    %v114 = vunpack.c.l.b16 %v66
    %v115 = vunpack.c.l.b16 %v67
    %v116 = vunpack.c.l.b16 %v68
    %v117 = vunpack.c.l.b16 %v69
    %v118 = vunpack.c.l.b16 %v70
    %v119 = vunpack.c.l.b16 %v71
    %v120 = vunpack.c.l.b16 %v72
    %v121 = vunpack.c.l.b16 %v73
    %v122 = vpack.c.b16 %v107, %v106
    %v123 = vpack.c.b16 %v109, %v108
    %v124 = vpack.c.b16 %v111, %v110
    %v125 = vpack.c.b16 %v113, %v112
    %v126 = vpack.c.b16 %v115, %v114
    %v127 = vpack.c.b16 %v117, %v116
    %v128 = vpack.c.b16 %v119, %v118
    %v129 = vpack.c.b16 %v121, %v120
    %v154 = vunpack.c.l.b16 %v74
    %v155 = vunpack.c.l.b16 %v75
    %v156 = vunpack.c.l.b16 %v76
    %v157 = vunpack.c.l.b16 %v77
    %v158 = vunpack.c.l.b16 %v78
    %v159 = vunpack.c.l.b16 %v79
    %v160 = vunpack.c.l.b16 %v80
    %v161 = vunpack.c.l.b16 %v81
    %v162 = vunpack.c.l.b16 %v82
    %v163 = vunpack.c.l.b16 %v83
    %v164 = vunpack.c.l.b16 %v84
    %v165 = vunpack.c.l.b16 %v85
    %v166 = vunpack.c.l.b16 %v86
    %v167 = vunpack.c.l.b16 %v87
    %v168 = vunpack.c.l.b16 %v88
    %v169 = vunpack.c.l.b16 %v89
    %v170 = vpack.c.b16 %v155, %v154
    %v171 = vpack.c.b16 %v157, %v156
    %v172 = vpack.c.b16 %v159, %v158
    %v173 = vpack.c.b16 %v161, %v160
    %v174 = vpack.c.b16 %v163, %v162
    %v175 = vpack.c.b16 %v165, %v164
    %v176 = vpack.c.b16 %v167, %v166
    %v177 = vpack.c.b16 %v169, %v168
    %186 = vmatpush.bf16.msra.mxu0 %v177
    %187 = vmatpush.bf16.msra.mxu0 %v176
    %188 = vmatpush.bf16.msra.mxu0 %v175
    %189 = vmatpush.bf16.msra.mxu0 %v174
    %190 = vmatpush.bf16.msra.mxu0 %v173
    %191 = vmatpush.bf16.msra.mxu0 %v172
    %192 = vmatpush.bf16.msra.mxu0 %v171
    %193 = vmatpush.bf16.msra.mxu0 %v170
    %194 = vmatmul.bf16.gmra.mxu0 %v122
    %v195 = vpop.f32.mrf.mxu0
    %v196 = vadd.f32 0.0, %v195
    %v197 = vpop.f32.mrf.mxu0
    %v198 = vadd.f32 0.0, %v197
    %199 = vmatmul.bf16.gmra.mxu0 %v123
    %v200 = vpop.f32.mrf.mxu0
    %v201 = vadd.f32 0.0, %v200
    %v202 = vpop.f32.mrf.mxu0
    %v203 = vadd.f32 0.0, %v202
    %204 = vmatmul.bf16.gmra.mxu0 %v124
    %v205 = vpop.f32.mrf.mxu0
    %v206 = vadd.f32 0.0, %v205
    %v207 = vpop.f32.mrf.mxu0
    %v208 = vadd.f32 0.0, %v207
    %209 = vmatmul.bf16.gmra.mxu0 %v125
    %v210 = vpop.f32.mrf.mxu0
    %v211 = vadd.f32 0.0, %v210
    %v212 = vpop.f32.mrf.mxu0
    %v213 = vadd.f32 0.0, %v212
    %214 = vmatmul.bf16.gmra.mxu0 %v126
    %v215 = vpop.f32.mrf.mxu0
    %v216 = vadd.f32 0.0, %v215
    %v217 = vpop.f32.mrf.mxu0
    %v218 = vadd.f32 0.0, %v217
    %219 = vmatmul.bf16.gmra.mxu0 %v127
    %v220 = vpop.f32.mrf.mxu0
    %v221 = vadd.f32 0.0, %v220
    %v222 = vpop.f32.mrf.mxu0
    %v223 = vadd.f32 0.0, %v222
    %224 = vmatmul.bf16.gmra.mxu0 %v128
    %v225 = vpop.f32.mrf.mxu0
    %v226 = vadd.f32 0.0, %v225
    %v227 = vpop.f32.mrf.mxu0
    %v228 = vadd.f32 0.0, %v227
    %229 = vmatmul.bf16.gmra.mxu0 %v129
    %v230 = vpop.f32.mrf.mxu0
    %v231 = vadd.f32 0.0, %v230
    %v232 = vpop.f32.mrf.mxu0
    %v233 = vadd.f32 0.0, %v232
    %234 = vdwg.mxu0
    %235 = vst [vmem:[#allocation2] sm:$0xff] %v196
    %236 = vst [vmem:[#allocation2 + $0x8] sm:$0xff] %v198
    %237 = vst [vmem:[#allocation2 + $0x10] sm:$0xff] %v201
    %238 = vst [vmem:[#allocation2 + $0x18] sm:$0xff] %v203
    %239 = vst [vmem:[#allocation2 + $0x20] sm:$0xff] %v206
    %240 = vst [vmem:[#allocation2 + $0x28] sm:$0xff] %v208
    %241 = vst [vmem:[#allocation2 + $0x30] sm:$0xff] %v211
    %242 = vst [vmem:[#allocation2 + $0x38] sm:$0xff] %v213
    %243 = vst [vmem:[#allocation2 + $0x40] sm:$0xff] %v216
    %244 = vst [vmem:[#allocation2 + $0x48] sm:$0xff] %v218
    %245 = vst [vmem:[#allocation2 + $0x50] sm:$0xff] %v221
    %246 = vst [vmem:[#allocation2 + $0x58] sm:$0xff] %v223
    %247 = vst [vmem:[#allocation2 + $0x60] sm:$0xff] %v226
    %248 = vst [vmem:[#allocation2 + $0x68] sm:$0xff] %v228
    %249 = vst [vmem:[#allocation2 + $0x70] sm:$0xff] %v231
    %250 = vst [vmem:[#allocation2 + $0x78] sm:$0xff] %v233
    %v251 = vld [vmem:[#allocation3] sm:$0xff]
    %v252 = vld [vmem:[#allocation3 + $0x8] sm:$0xff]
    %v253 = vmul.f32 %v251, 0.9
    %v254 = vmul.f32 %v252, 0.9
    %v255 = vld [vmem:[#allocation2] sm:$0xff]
    %v256 = vld [vmem:[#allocation2 + $0x8] sm:$0xff]
    %v257 = vadd.f32 %v253, %v255
    %v258 = vadd.f32 %v254, %v256
    %vm259 = vcmp.ge.f32.partialorder %v257, 1.0
    %vm260 = vcmp.ge.f32.partialorder %v258, 1.0
    %v261 = vsel %vm259, 1.0, 0.0
    %v262 = vsel %vm260, 1.0, 0.0
    %v263 = vpack.c.bf16 %v261, %v261
    %v264 = vpack.c.bf16 %v262, %v262
    %265 = vst [vmem:[#allocation9] sm:$0xf] %v263
    %266 = vst [vmem:[#allocation9 + $0x4] sm:$0xf] %v264
    %v267 = vsub.f32 %v257, 1.0
    %v268 = vsub.f32 %v258, 1.0
    %v269 = vsel %vm259, %v267, %v257
    %v270 = vsel %vm260, %v268, %v258
    %v271 = vmul.f32 %v269, 0.9
    %v272 = vmul.f32 %v270, 0.9
    %v273 = vld [vmem:[#allocation2 + $0x10] sm:$0xff]
    %v274 = vld [vmem:[#allocation2 + $0x18] sm:$0xff]
    %v275 = vadd.f32 %v271, %v273
    %v276 = vadd.f32 %v272, %v274
    %vm277 = vcmp.ge.f32.partialorder %v275, 1.0
    %vm278 = vcmp.ge.f32.partialorder %v276, 1.0
    %v279 = vsel %vm277, 1.0, 0.0
    %v280 = vsel %vm278, 1.0, 0.0
    %v281 = vpack.c.bf16 %v279, %v279
    %v282 = vpack.c.bf16 %v280, %v280
    %283 = vst [vmem:[#allocation9 + $0x8] sm:$0xf] %v281
    %284 = vst [vmem:[#allocation9 + $0xc] sm:$0xf] %v282
    %v285 = vsub.f32 %v275, 1.0
    %v286 = vsub.f32 %v276, 1.0
    %v287 = vsel %vm277, %v285, %v275
    %v288 = vsel %vm278, %v286, %v276
    %v289 = vmul.f32 %v287, 0.9
    %v290 = vmul.f32 %v288, 0.9
    %v291 = vld [vmem:[#allocation2 + $0x20] sm:$0xff]
    %v292 = vld [vmem:[#allocation2 + $0x28] sm:$0xff]
    %v293 = vadd.f32 %v289, %v291
    %v294 = vadd.f32 %v290, %v292
    %vm295 = vcmp.ge.f32.partialorder %v293, 1.0
    %vm296 = vcmp.ge.f32.partialorder %v294, 1.0
    %v297 = vsel %vm295, 1.0, 0.0
    %v298 = vsel %vm296, 1.0, 0.0
    %v299 = vpack.c.bf16 %v297, %v297
    %v300 = vpack.c.bf16 %v298, %v298
    %301 = vst [vmem:[#allocation9 + $0x10] sm:$0xf] %v299
    %302 = vst [vmem:[#allocation9 + $0x14] sm:$0xf] %v300
    %v303 = vsub.f32 %v293, 1.0
    %v304 = vsub.f32 %v294, 1.0
    %v305 = vsel %vm295, %v303, %v293
    %v306 = vsel %vm296, %v304, %v294
    %v307 = vmul.f32 %v305, 0.9
    %v308 = vmul.f32 %v306, 0.9
    %v309 = vld [vmem:[#allocation2 + $0x30] sm:$0xff]
    %v310 = vld [vmem:[#allocation2 + $0x38] sm:$0xff]
    %v311 = vadd.f32 %v307, %v309
    %v312 = vadd.f32 %v308, %v310
    %vm313 = vcmp.ge.f32.partialorder %v311, 1.0
    %vm314 = vcmp.ge.f32.partialorder %v312, 1.0
    %v315 = vsel %vm313, 1.0, 0.0
    %v316 = vsel %vm314, 1.0, 0.0
    %v317 = vpack.c.bf16 %v315, %v315
    %v318 = vpack.c.bf16 %v316, %v316
    %319 = vst [vmem:[#allocation9 + $0x18] sm:$0xf] %v317
    %320 = vst [vmem:[#allocation9 + $0x1c] sm:$0xf] %v318
    %v321 = vsub.f32 %v311, 1.0
    %v322 = vsub.f32 %v312, 1.0
    %v323 = vsel %vm313, %v321, %v311
    %v324 = vsel %vm314, %v322, %v312
    %v325 = vmul.f32 %v323, 0.9
    %v326 = vmul.f32 %v324, 0.9
    %v327 = vld [vmem:[#allocation2 + $0x40] sm:$0xff]
    %v328 = vld [vmem:[#allocation2 + $0x48] sm:$0xff]
    %v329 = vadd.f32 %v325, %v327
    %v330 = vadd.f32 %v326, %v328
    %vm331 = vcmp.ge.f32.partialorder %v329, 1.0
    %vm332 = vcmp.ge.f32.partialorder %v330, 1.0
    %v333 = vsel %vm331, 1.0, 0.0
    %v334 = vsel %vm332, 1.0, 0.0
    %v335 = vpack.c.bf16 %v333, %v333
    %v336 = vpack.c.bf16 %v334, %v334
    %337 = vst [vmem:[#allocation9 + $0x20] sm:$0xf] %v335
    %338 = vst [vmem:[#allocation9 + $0x24] sm:$0xf] %v336
    %v339 = vsub.f32 %v329, 1.0
    %v340 = vsub.f32 %v330, 1.0
    %v341 = vsel %vm331, %v339, %v329
    %v342 = vsel %vm332, %v340, %v330
    %v343 = vmul.f32 %v341, 0.9
    %v344 = vmul.f32 %v342, 0.9
    %v345 = vld [vmem:[#allocation2 + $0x50] sm:$0xff]
    %v346 = vld [vmem:[#allocation2 + $0x58] sm:$0xff]
    %v347 = vadd.f32 %v343, %v345
    %v348 = vadd.f32 %v344, %v346
    %vm349 = vcmp.ge.f32.partialorder %v347, 1.0
    %vm350 = vcmp.ge.f32.partialorder %v348, 1.0
    %v351 = vsel %vm349, 1.0, 0.0
    %v352 = vsel %vm350, 1.0, 0.0
    %v353 = vpack.c.bf16 %v351, %v351
    %v354 = vpack.c.bf16 %v352, %v352
    %355 = vst [vmem:[#allocation9 + $0x28] sm:$0xf] %v353
    %356 = vst [vmem:[#allocation9 + $0x2c] sm:$0xf] %v354
    %v357 = vsub.f32 %v347, 1.0
    %v358 = vsub.f32 %v348, 1.0
    %v359 = vsel %vm349, %v357, %v347
    %v360 = vsel %vm350, %v358, %v348
    %v361 = vmul.f32 %v359, 0.9
    %v362 = vmul.f32 %v360, 0.9
    %v363 = vld [vmem:[#allocation2 + $0x60] sm:$0xff]
    %v364 = vld [vmem:[#allocation2 + $0x68] sm:$0xff]
    %v365 = vadd.f32 %v361, %v363
    %v366 = vadd.f32 %v362, %v364
    %vm367 = vcmp.ge.f32.partialorder %v365, 1.0
    %vm368 = vcmp.ge.f32.partialorder %v366, 1.0
    %v369 = vsel %vm367, 1.0, 0.0
    %v370 = vsel %vm368, 1.0, 0.0
    %v371 = vpack.c.bf16 %v369, %v369
    %v372 = vpack.c.bf16 %v370, %v370
    %373 = vst [vmem:[#allocation9 + $0x30] sm:$0xf] %v371
    %374 = vst [vmem:[#allocation9 + $0x34] sm:$0xf] %v372
    %v375 = vsub.f32 %v365, 1.0
    %v376 = vsub.f32 %v366, 1.0
    %v377 = vsel %vm367, %v375, %v365
    %v378 = vsel %vm368, %v376, %v366
    %v379 = vmul.f32 %v377, 0.9
    %v380 = vmul.f32 %v378, 0.9
    %v381 = vld [vmem:[#allocation2 + $0x70] sm:$0xff]
    %v382 = vld [vmem:[#allocation2 + $0x78] sm:$0xff]
    %v383 = vadd.f32 %v379, %v381
    %v384 = vadd.f32 %v380, %v382
    %vm385 = vcmp.ge.f32.partialorder %v383, 1.0
    %vm386 = vcmp.ge.f32.partialorder %v384, 1.0
    %v387 = vsel %vm385, 1.0, 0.0
    %v388 = vsel %vm386, 1.0, 0.0
    %v389 = vpack.c.bf16 %v387, %v387
    %v390 = vpack.c.bf16 %v388, %v388
    %391 = vst [vmem:[#allocation9 + $0x38] sm:$0xf] %v389
    %392 = vst [vmem:[#allocation9 + $0x3c] sm:$0xf] %v390
    %v393 = vsub.f32 %v383, 1.0
    %v394 = vsub.f32 %v384, 1.0
    %v395 = vsel %vm385, %v393, %v383
    %v396 = vsel %vm386, %v394, %v384
    %397 = vst [vmem:[#allocation3] sm:$0xff] %v395
    %398 = vst [vmem:[#allocation3 + $0x8] sm:$0xff] %v396
    // Predicated region
    $region22: #{tpu_custom_call.1} parent=1 // pred_check
      _
    $region23: #{tpu_custom_call.1} parent=1 // pred_check_branch
      %400 = sbr.rel (0) target = $region25
    $region24: #{tpu_custom_call.1} parent=1 // pred_region
      %s401 = sadd.s32 0, 0
      %s402 = smul.u32 16, %s401
      %404 = vsyncadd [#allocation6], 0
      %s405 = smul.addr %s402, 4
      %s406 = scalar_lea.hbm %s2, %s405
      %s407 = sshll.u32 [#allocation9], 4
      %s408 = int_to_ptr.vmem [resolvable:$true] %s407
      %s409 = sshll.u32 %s406, 4
      %s410 = int_to_ptr.hbm [resolvable:$true] %s409
      %415 = dma.vmem_to_hbm [thread:$0]  %s408, 1024, %s410, [#allocation6], 64, 64, 4
    $region25: #{tpu_custom_call.1} parent=1 // pred_fallthru
      _
    // Predicated region
    $region26: #{tpu_custom_call.1} parent=1 // pred_check
      _
    $region27: #{tpu_custom_call.1} parent=1 // pred_check_branch
      %417 = sbr.rel (0) target = $region29
    $region28: #{tpu_custom_call.1} parent=1 // pred_region
      %419 = dma.done [#allocation6], 1024
    $region29: #{tpu_custom_call.1} parent=1 // pred_fallthru
      _
    %420 = vsyncpa [#allocation5], 1
    %421 = vsyncpa [#allocation8], 1
    %422 = vsyncpa [#allocation6], 1

</llo_original>
